<compile_context>
chip_gen: v5e
topology: v5e:2x2
jax: 0.10.0
libtpu: 0.0.40
codegen_flags: <defaults>
</compile_context>

<pallas_src>
import functools

import jax
import jax.numpy as jnp
from jax.experimental import pallas as pl
from jax.experimental.pallas import tpu as pltpu

LRELU_SLOPE = 0.01   # nn.LeakyReLU() default negative_slope
BN_EPS = 1e-5        # nn.BatchNorm1d default eps


def _round_up(x, m):
    return ((x + m - 1) // m) * m


# ---------------------------------------------------------------------------
# Fused MLP kernel: for each row tile, run every layer
#   (bf16 matmul on MXU, f32 accumulate -> + folded BN/bias shift -> LeakyReLU)
# back-to-back entirely in VMEM.
# ---------------------------------------------------------------------------
def _make_mlp_kernel(n_layers):
    def kernel(*refs):
        # refs = x_ref, (w, shift) * n_layers, o_ref
        x_ref = refs[0]
        o_ref = refs[-1]
        h = x_ref[...].astype(jnp.bfloat16)            # cast in-kernel: x streams as f32
        acc = None
        for l in range(n_layers):
            w_ref, t_ref = refs[1 + 2 * l: 1 + 2 * (l + 1)]
            acc = jnp.dot(h, w_ref[...],               # MXU: bf16 in, f32 accumulate
                          preferred_element_type=jnp.float32)
            acc = acc + t_ref[...]                     # Linear bias + BN affine (folded)
            acc = jnp.maximum(acc, LRELU_SLOPE * acc)  # LeakyReLU(0.01): valid, 0<slope<1
            h = acc.astype(jnp.bfloat16)               # bf16 feed for the next MXU matmul
        o_ref[...] = acc                               # f32, lane-dense last dim
    return kernel


def _choose_tm(M, Din, d_last, *, buffer_budget_bytes=24 << 20):
    """Largest tile under the VMEM pipeline-buffer budget, minimizing pad waste,
    preferring >=2 grid tiles (so v7x megacore can shard the 'parallel' axis)."""
    candidates = [2048, 1024, 512, 256, 128, 64, 32, 16, 8]
    feasible = []
    for tm in candidates:
        # double-buffered f32 input tile + double-buffered f32 output tile
        buf = 2 * tm * Din * 4 + 2 * tm * d_last * 4
        if buf <= buffer_budget_bytes:
            feasible.append(tm)
    if not feasible:
        feasible = [8]

    def key(tm):
        m_pad = _round_up(M, tm)
        n_tiles = m_pad // tm
        return (m_pad - M,                 # 1) least padded rows (wasted DMA + matmul)
                0 if n_tiles >= 2 else 1,  # 2) keep >=2 tiles when possible (v7x 2 TCs)
                -tm)                       # 3) then largest tile (amortize step overhead)
    return min(feasible, key=key)


def mlp_forward(x2d, layer_params):
    """x2d: (M, Din) f32.  layer_params: list of (W[out,in], b, gamma, beta, rmean, rvar)."""
    M, Din = x2d.shape
    n_layers = len(layer_params)

    # ---- fold BN (eval-mode running stats) + bias into weight columns / shift ----
    # z = h @ W^T + b ; BN(z) = z*scale + (beta - rmean*scale), scale = gamma/sqrt(var+eps)
    #   => h @ (W^T * scale) + [(b - rmean)*scale + beta]
    # NOTE: folding assumes gamma/std is O(1) so bf16 weight columns don't under/overflow.
    kernel_args = []
    in_specs = [None]                       # slot 0 filled with the x spec below
    weight_bytes = 0
    d_in = Din
    for (w, b, gamma, beta, rmean, rvar) in layer_params:
        d_out, d_in_l = w.shape
        assert d_in_l == d_in, (d_in_l, d_in)
        scale = (gamma / jnp.sqrt(rvar + BN_EPS)).astype(jnp.float32)        # (d_out,)
        wm = (jnp.transpose(w).astype(jnp.float32) * scale[None, :]).astype(jnp.bfloat16)
        shift = ((b - rmean) * scale + beta).reshape(1, d_out).astype(jnp.float32)
        kernel_args += [wm, shift]
        in_specs += [
            pl.BlockSpec((d_in, d_out), lambda i: (0, 0)),                   # resident weight
            pl.BlockSpec((1, d_out), lambda i: (0, 0)),                      # folded shift
        ]
        weight_bytes += d_in * d_out * 2 + d_out * 4
        d_in = d_out
    d_last = d_in

    # ---- row tiling: minimize padding, keep pipeline buffers inside VMEM budget ----
    tm = _choose_tm(M, Din, d_last)
    M_pad = _round_up(M, tm)
    x_in = x2d.astype(jnp.float32)
    if M_pad != M:
        x_in = jnp.pad(x_in, ((0, M_pad - M), (0, 0)))   # only when strictly needed
    in_specs[0] = pl.BlockSpec((tm, Din), lambda i: (i, 0))

    # explicit scoped-VMEM limit: buffers + resident params + headroom,
    # clamped to [32 MiB, 48 MiB] so it is safe on v5e/v6e (128 MiB) and v7x (64 MiB).
    vmem_need = 2 * tm * Din * 4 + 2 * tm * d_last * 4 + weight_bytes + (4 << 20)
    vmem_limit = int(min(max(vmem_need, 32 << 20), 48 << 20))

    out = pl.pallas_call(
        _make_mlp_kernel(n_layers),
        out_shape=jax.ShapeDtypeStruct((M_pad, d_last), jnp.float32),
        grid=(M_pad // tm,),
        in_specs=in_specs,
        out_specs=pl.BlockSpec((tm, d_last), lambda i: (i, 0)),
        compiler_params=pltpu.CompilerParams(
            dimension_semantics=("parallel",),
            vmem_limit_bytes=vmem_limit,
        ),
    )(x_in, *kernel_args)
    return out[:M]


def neural_net_forward(x, layer_params, n_channels_in=1):
    """Mirrors NeuralNet.forward (args.vbnorm=False): flatten image input, then fused MLP."""
    if x.ndim > 2:
        if n_channels_in > 1:
            x = x.reshape(-1, x.shape[-1] ** 2 * n_channels_in)
        else:
            x = x.reshape(-1, x.shape[-1] ** 2)
    # TODO(synk): args.dropout / VirtualBatchNormNN / training-mode batch statistics
    # are disabled under the assumed config (eval-mode inference with running stats).
    return mlp_forward(x.astype(jnp.float32), layer_params)


# ---------------------------------------------------------------------------
# Pure-JAX reference (f32) for the numerical check.
# ---------------------------------------------------------------------------
def reference_forward(x, layer_params, n_channels_in=1):
    if x.ndim > 2:
        if n_channels_in > 1:
            x = x.reshape(-1, x.shape[-1] ** 2 * n_channels_in)
        else:
            x = x.reshape(-1, x.shape[-1] ** 2)
    h = x.astype(jnp.float32)
    for (w, b, gamma, beta, rmean, rvar) in layer_params:
        z = h @ w.T + b
        z = (z - rmean) / jnp.sqrt(rvar + BN_EPS) * gamma + beta
        h = jnp.where(z >= 0, z, LRELU_SLOPE * z)
    return h


# ---------------------------------------------------------------------------
# Deterministic parameter init (synthetic; mirrors PyTorch shapes)
# ---------------------------------------------------------------------------
def init_layer_params(key, din, dout):
    k1, k2, k3, k4, k5 = jax.random.split(key, 5)
    w = jax.random.normal(k1, (dout, din), jnp.float32) / jnp.sqrt(din)      # Linear.weight (out, in)
    b = 0.01 * jax.random.normal(k2, (dout,), jnp.float32)                   # Linear.bias
    gamma = 1.0 + 0.1 * jax.random.normal(k3, (dout,), jnp.float32)          # BN weight
    beta = 0.1 * jax.random.normal(k4, (dout,), jnp.float32)                 # BN bias
    rmean = 0.1 * jax.random.normal(k5, (dout,), jnp.float32)                # BN running_mean
    rvar = jnp.ones((dout,), jnp.float32)                                    # BN running_var
    return (w, b, gamma, beta, rmean, rvar)


if __name__ == "__main__":
    key = jax.random.PRNGKey(0)

    # Small deterministic example: batch=2, n_channels_in=4, 16x16 spatial,
    # hidden_size=128, extra_layers=2  ->  Linear(1024,128) + 2x Linear(128,128).
    N, C, HW = 2, 4, 16
    input_size = HW * HW
    n_channels_in = C
    hidden_size = 128
    extra_layers = 2

    dims = [(input_size * n_channels_in, hidden_size)] + [(hidden_size, hidden_size)] * extra_layers
    keys = jax.random.split(key, len(dims) + 1)
    x = jax.random.normal(keys[0], (N, C, HW, HW), jnp.float32)              # PyTorch-style NCHW image batch
    params = [init_layer_params(k, din, dout) for k, (din, dout) in zip(keys[1:], dims)]

    fwd = jax.jit(functools.partial(neural_net_forward, n_channels_in=n_channels_in))
    out = jax.block_until_ready(fwd(x, params))
    assert out.shape == (N, hidden_size), out.shape
    assert bool(jnp.all(jnp.isfinite(out)))

    ref = reference_forward(x, params, n_channels_in=n_channels_in)
    rel_err = float(jnp.max(jnp.abs(out - ref)) / (jnp.max(jnp.abs(ref)) + 1e-6))
    assert rel_err < 2e-2, rel_err   # bf16 MXU matmuls + folded BN vs f32 reference

    print("KERNEL_OK")
</pallas_src>

<mosaic_0001>
module attributes {stable_mosaic.version = 11 : i64} {
  func.func @kernel(%arg0: i32, %arg1: memref<8x1024xf32, #tpu.memory_space<vmem>>, %arg2: memref<1024x128xbf16, #tpu.memory_space<vmem>>, %arg3: memref<1x128xf32, #tpu.memory_space<vmem>>, %arg4: memref<128x128xbf16, #tpu.memory_space<vmem>>, %arg5: memref<1x128xf32, #tpu.memory_space<vmem>>, %arg6: memref<128x128xbf16, #tpu.memory_space<vmem>>, %arg7: memref<1x128xf32, #tpu.memory_space<vmem>>, %arg8: memref<8x128xf32, #tpu.memory_space<vmem>>) attributes {dimension_semantics = [#tpu.dimension_semantics<parallel>], iteration_bounds = array<i64: 1>, scalar_prefetch = 0 : i64, scratch_operands = 0 : i64, tpu.core_type = #tpu.core_type<tc>, window_params = [{transform_indices = @transform_0, window_bounds = array<i64: 8, 1024>}, {pipeline_mode = #tpu.pipeline_mode<synchronous>, transform_indices = @transform_1, window_bounds = array<i64: 1024, 128>}, {pipeline_mode = #tpu.pipeline_mode<synchronous>, transform_indices = @transform_2, window_bounds = array<i64: 1, 128>}, {pipeline_mode = #tpu.pipeline_mode<synchronous>, transform_indices = @transform_3, window_bounds = array<i64: 128, 128>}, {pipeline_mode = #tpu.pipeline_mode<synchronous>, transform_indices = @transform_4, window_bounds = array<i64: 1, 128>}, {pipeline_mode = #tpu.pipeline_mode<synchronous>, transform_indices = @transform_5, window_bounds = array<i64: 128, 128>}, {pipeline_mode = #tpu.pipeline_mode<synchronous>, transform_indices = @transform_6, window_bounds = array<i64: 1, 128>}, {transform_indices = @transform_7, window_bounds = array<i64: 8, 128>}]} {
    %c0 = arith.constant 0 : index
    %c0_0 = arith.constant 0 : index
    %0 = vector.load %arg1[%c0, %c0_0] : memref<8x1024xf32, #tpu.memory_space<vmem>>, vector<8x1024xf32>
    %1 = arith.truncf %0 : vector<8x1024xf32> to vector<8x1024xbf16>
    %c0_1 = arith.constant 0 : index
    %c0_2 = arith.constant 0 : index
    %2 = vector.load %arg2[%c0_1, %c0_2] : memref<1024x128xbf16, #tpu.memory_space<vmem>>, vector<1024x128xbf16>
    %cst = arith.constant dense<0.000000e+00> : vector<8x128xf32>
    %3 = tpu.matmul %1, %2, %cst {dimension_numbers = #tpu.dot_dimension_numbers<[1], [0], [0], [1], [0, 0, 1, 1], [], []>} : vector<8x1024xbf16>, vector<1024x128xbf16>, vector<8x128xf32> -> vector<8x128xf32>
    %c0_3 = arith.constant 0 : index
    %c0_4 = arith.constant 0 : index
    %4 = vector.load %arg3[%c0_3, %c0_4] : memref<1x128xf32, #tpu.memory_space<vmem>>, vector<1x128xf32>
    %5 = vector.broadcast %4 : vector<1x128xf32> to vector<8x128xf32>
    %6 = arith.addf %3, %5 : vector<8x128xf32>
    %cst_5 = arith.constant 0.00999999977 : f32
    %7 = vector.broadcast %cst_5 : f32 to vector<8x128xf32>
    %8 = arith.mulf %7, %6 : vector<8x128xf32>
    %9 = arith.maximumf %6, %8 : vector<8x128xf32>
    %10 = arith.truncf %9 : vector<8x128xf32> to vector<8x128xbf16>
    %c0_6 = arith.constant 0 : index
    %c0_7 = arith.constant 0 : index
    %11 = vector.load %arg4[%c0_6, %c0_7] : memref<128x128xbf16, #tpu.memory_space<vmem>>, vector<128x128xbf16>
    %cst_8 = arith.constant dense<0.000000e+00> : vector<8x128xf32>
    %12 = tpu.matmul %10, %11, %cst_8 {dimension_numbers = #tpu.dot_dimension_numbers<[1], [0], [0], [1], [0, 0, 1, 1], [], []>} : vector<8x128xbf16>, vector<128x128xbf16>, vector<8x128xf32> -> vector<8x128xf32>
    %c0_9 = arith.constant 0 : index
    %c0_10 = arith.constant 0 : index
    %13 = vector.load %arg5[%c0_9, %c0_10] : memref<1x128xf32, #tpu.memory_space<vmem>>, vector<1x128xf32>
    %14 = vector.broadcast %13 : vector<1x128xf32> to vector<8x128xf32>
    %15 = arith.addf %12, %14 : vector<8x128xf32>
    %cst_11 = arith.constant 0.00999999977 : f32
    %16 = vector.broadcast %cst_11 : f32 to vector<8x128xf32>
    %17 = arith.mulf %16, %15 : vector<8x128xf32>
    %18 = arith.maximumf %15, %17 : vector<8x128xf32>
    %19 = arith.truncf %18 : vector<8x128xf32> to vector<8x128xbf16>
    %c0_12 = arith.constant 0 : index
    %c0_13 = arith.constant 0 : index
    %20 = vector.load %arg6[%c0_12, %c0_13] : memref<128x128xbf16, #tpu.memory_space<vmem>>, vector<128x128xbf16>
    %cst_14 = arith.constant dense<0.000000e+00> : vector<8x128xf32>
    %21 = tpu.matmul %19, %20, %cst_14 {dimension_numbers = #tpu.dot_dimension_numbers<[1], [0], [0], [1], [0, 0, 1, 1], [], []>} : vector<8x128xbf16>, vector<128x128xbf16>, vector<8x128xf32> -> vector<8x128xf32>
    %c0_15 = arith.constant 0 : index
    %c0_16 = arith.constant 0 : index
    %22 = vector.load %arg7[%c0_15, %c0_16] : memref<1x128xf32, #tpu.memory_space<vmem>>, vector<1x128xf32>
    %23 = vector.broadcast %22 : vector<1x128xf32> to vector<8x128xf32>
    %24 = arith.addf %21, %23 : vector<8x128xf32>
    %cst_17 = arith.constant 0.00999999977 : f32
    %25 = vector.broadcast %cst_17 : f32 to vector<8x128xf32>
    %26 = arith.mulf %25, %24 : vector<8x128xf32>
    %27 = arith.maximumf %24, %26 : vector<8x128xf32>
    %c0_18 = arith.constant 0 : index
    %c0_19 = arith.constant 0 : index
    %28 = vector.load %arg8[%c0_18, %c0_19] : memref<8x128xf32, #tpu.memory_space<vmem>>, vector<8x128xf32>
    tpu.vector_store %arg8[%c0_18, %c0_19], %27 {strides = array<i32>} : memref<8x128xf32, #tpu.memory_space<vmem>>, vector<8x128xf32>,
    return
  }
  func.func @transform_0(%arg0: i32) -> (i32, i32) {
    %c0_i32 = arith.constant 0 : i32
    %c0_i32_0 = arith.constant 0 : i32
    return %arg0, %c0_i32 : i32, i32
  }
  func.func @transform_1(%arg0: i32) -> (i32, i32) {
    %c0_i32 = arith.constant 0 : i32
    %c0_i32_0 = arith.constant 0 : i32
    %c0_i32_1 = arith.constant 0 : i32
    return %c0_i32, %c0_i32_0 : i32, i32
  }
  func.func @transform_2(%arg0: i32) -> (i32, i32) {
    %c0_i32 = arith.constant 0 : i32
    %c0_i32_0 = arith.constant 0 : i32
    %c0_i32_1 = arith.constant 0 : i32
    return %c0_i32, %c0_i32_0 : i32, i32
  }
  func.func @transform_3(%arg0: i32) -> (i32, i32) {
    %c0_i32 = arith.constant 0 : i32
    %c0_i32_0 = arith.constant 0 : i32
    %c0_i32_1 = arith.constant 0 : i32
    return %c0_i32, %c0_i32_0 : i32, i32
  }
  func.func @transform_4(%arg0: i32) -> (i32, i32) {
    %c0_i32 = arith.constant 0 : i32
    %c0_i32_0 = arith.constant 0 : i32
    %c0_i32_1 = arith.constant 0 : i32
    return %c0_i32, %c0_i32_0 : i32, i32
  }
  func.func @transform_5(%arg0: i32) -> (i32, i32) {
    %c0_i32 = arith.constant 0 : i32
    %c0_i32_0 = arith.constant 0 : i32
    %c0_i32_1 = arith.constant 0 : i32
    return %c0_i32, %c0_i32_0 : i32, i32
  }
  func.func @transform_6(%arg0: i32) -> (i32, i32) {
    %c0_i32 = arith.constant 0 : i32
    %c0_i32_0 = arith.constant 0 : i32
    %c0_i32_1 = arith.constant 0 : i32
    return %c0_i32, %c0_i32_0 : i32, i32
  }
  func.func @transform_7(%arg0: i32) -> (i32, i32) {
    %c0_i32 = arith.constant 0 : i32
    %c0_i32_0 = arith.constant 0 : i32
    return %arg0, %c0_i32 : i32, i32
  }
}

</mosaic_0001>

<llo_original>
// kernel: neural_net_forward.1
$region0: #{neural_net_forward.1}
  #allocation0 [shape = 'u32[]', space=smem, size = 0x4, offset = 0x4, fixed_abs, tag = 'smem constant byte address 0x4 - core index']
  #allocation1 [shape = 'u32[72,128]{1,0:T(1,128)}', space=vmem, size = 0x9000, scoped, tag = 'internal scratch']
  %s0 = inlined_call_operand.vmem [shape: f32[8,1024], index: 0, kind: input, shape index: {}]
  %s1 = inlined_call_operand.vmem [shape: bf16[1024,128], index: 1, kind: input, shape index: {}]
  %s2 = inlined_call_operand.vmem [shape: f32[1,128], index: 2, kind: input, shape index: {}]
  %s3 = inlined_call_operand.vmem [shape: bf16[128,128], index: 3, kind: input, shape index: {}]
  %s4 = inlined_call_operand.vmem [shape: f32[1,128], index: 4, kind: input, shape index: {}]
  %s5 = inlined_call_operand.vmem [shape: bf16[128,128], index: 5, kind: input, shape index: {}]
  %s6 = inlined_call_operand.vmem [shape: f32[1,128], index: 6, kind: input, shape index: {}]
  %s7 = inlined_call_operand.vmem [shape: f32[8,128], index: 7, kind: output, shape index: {}]
  %s8 = sld [smem:[#allocation0]]
  $region38: #{neural_net_forward.1} parent=0
    _
  %s10 = ssub.s32 1, %s8
  %s11 = scalar_select 0, %s10, %s8
  // Predicated region
  $region2: #{neural_net_forward.1} parent=0 // pred_check
    _
  $region3: #{neural_net_forward.1} parent=0 // pred_check_branch
    %13 = sbr.rel (0) target = $region5
  $region4: #{neural_net_forward.1} parent=0 // pred_region
    _
  $region5: #{neural_net_forward.1} parent=0 // pred_fallthru
    _
  // Predicated region
  $region6: #{neural_net_forward.1} parent=0 // pred_check
    _
  $region7: #{neural_net_forward.1} parent=0 // pred_check_branch
    %15 = sbr.rel (0) target = $region9
  $region8: #{neural_net_forward.1} parent=0 // pred_region
    _
  $region9: #{neural_net_forward.1} parent=0 // pred_fallthru
    _
  // Predicated region
  $region10: #{neural_net_forward.1} parent=0 // pred_check
    _
  $region11: #{neural_net_forward.1} parent=0 // pred_check_branch
    %17 = sbr.rel (0) target = $region13
  $region12: #{neural_net_forward.1} parent=0 // pred_region
    _
  $region13: #{neural_net_forward.1} parent=0 // pred_fallthru
    _
  // Predicated region
  $region14: #{neural_net_forward.1} parent=0 // pred_check
    _
  $region15: #{neural_net_forward.1} parent=0 // pred_check_branch
    %19 = sbr.rel (0) target = $region17
  $region16: #{neural_net_forward.1} parent=0 // pred_region
    _
  $region17: #{neural_net_forward.1} parent=0 // pred_fallthru
    _
  // Predicated region
  $region18: #{neural_net_forward.1} parent=0 // pred_check
    _
  $region19: #{neural_net_forward.1} parent=0 // pred_check_branch
    %21 = sbr.rel (0) target = $region21
  $region20: #{neural_net_forward.1} parent=0 // pred_region
    _
  $region21: #{neural_net_forward.1} parent=0 // pred_fallthru
    _
  // Predicated region
  $region22: #{neural_net_forward.1} parent=0 // pred_check
    _
  $region23: #{neural_net_forward.1} parent=0 // pred_check_branch
    %23 = sbr.rel (0) target = $region25
  $region24: #{neural_net_forward.1} parent=0 // pred_region
    _
  $region25: #{neural_net_forward.1} parent=0 // pred_fallthru
    _
  // Predicated region
  $region26: #{neural_net_forward.1} parent=0 // pred_check
    _
  $region27: #{neural_net_forward.1} parent=0 // pred_check_branch
    %25 = sbr.rel (0) target = $region29
  $region28: #{neural_net_forward.1} parent=0 // pred_region
    _
  $region29: #{neural_net_forward.1} parent=0 // pred_fallthru
    _
  %v26 = vld [vmem:[%s0] sm:$0xff]
  %v27 = vld [vmem:[%s0 + $0x8] sm:$0xff]
  %v28 = vld [vmem:[%s0 + $0x10] sm:$0xff]
  %v29 = vld [vmem:[%s0 + $0x18] sm:$0xff]
  %v30 = vld [vmem:[%s0 + $0x20] sm:$0xff]
  %v31 = vld [vmem:[%s0 + $0x28] sm:$0xff]
  %v32 = vld [vmem:[%s0 + $0x30] sm:$0xff]
  %v33 = vld [vmem:[%s0 + $0x38] sm:$0xff]
  %v34 = vpack.c.bf16 %v26, %v26
  %v35 = vpack.c.bf16 %v27, %v27
  %v36 = vpack.c.bf16 %v28, %v28
  %v37 = vpack.c.bf16 %v29, %v29
  %v38 = vpack.c.bf16 %v30, %v30
  %v39 = vpack.c.bf16 %v31, %v31
  %v40 = vpack.c.bf16 %v32, %v32
  %v41 = vpack.c.bf16 %v33, %v33
  %v42 = vld [vmem:[%s1] sm:$0xf]
  %v43 = vld [vmem:[%s1 + $0x4] sm:$0xf]
  %v44 = vld [vmem:[%s1 + $0x8] sm:$0xf]
  %v45 = vld [vmem:[%s1 + $0xc] sm:$0xf]
  %v46 = vld [vmem:[%s1 + $0x10] sm:$0xf]
  %v47 = vld [vmem:[%s1 + $0x14] sm:$0xf]
  %v48 = vld [vmem:[%s1 + $0x18] sm:$0xf]
  %v49 = vld [vmem:[%s1 + $0x1c] sm:$0xf]
  %v50 = vld [vmem:[%s1 + $0x20] sm:$0xf]
  %v51 = vld [vmem:[%s1 + $0x24] sm:$0xf]
  %v52 = vld [vmem:[%s1 + $0x28] sm:$0xf]
  %v53 = vld [vmem:[%s1 + $0x2c] sm:$0xf]
  %v54 = vld [vmem:[%s1 + $0x30] sm:$0xf]
  %v55 = vld [vmem:[%s1 + $0x34] sm:$0xf]
  %v56 = vld [vmem:[%s1 + $0x38] sm:$0xf]
  %v57 = vld [vmem:[%s1 + $0x3c] sm:$0xf]
  %v58 = vld [vmem:[%s1 + $0x40] sm:$0xf]
  %v59 = vld [vmem:[%s1 + $0x44] sm:$0xf]
  %v60 = vld [vmem:[%s1 + $0x48] sm:$0xf]
  %v61 = vld [vmem:[%s1 + $0x4c] sm:$0xf]
  %v62 = vld [vmem:[%s1 + $0x50] sm:$0xf]
  %v63 = vld [vmem:[%s1 + $0x54] sm:$0xf]
  %v64 = vld [vmem:[%s1 + $0x58] sm:$0xf]
  %v65 = vld [vmem:[%s1 + $0x5c] sm:$0xf]
  %v66 = vld [vmem:[%s1 + $0x60] sm:$0xf]
  %v67 = vld [vmem:[%s1 + $0x64] sm:$0xf]
  %v68 = vld [vmem:[%s1 + $0x68] sm:$0xf]
  %v69 = vld [vmem:[%s1 + $0x6c] sm:$0xf]
  %v70 = vld [vmem:[%s1 + $0x70] sm:$0xf]
  %v71 = vld [vmem:[%s1 + $0x74] sm:$0xf]
  %v72 = vld [vmem:[%s1 + $0x78] sm:$0xf]
  %v73 = vld [vmem:[%s1 + $0x7c] sm:$0xf]
  %v74 = vld [vmem:[%s1 + $0x80] sm:$0xf]
  %v75 = vld [vmem:[%s1 + $0x84] sm:$0xf]
  %v76 = vld [vmem:[%s1 + $0x88] sm:$0xf]
  %v77 = vld [vmem:[%s1 + $0x8c] sm:$0xf]
  %v78 = vld [vmem:[%s1 + $0x90] sm:$0xf]
  %v79 = vld [vmem:[%s1 + $0x94] sm:$0xf]
  %v80 = vld [vmem:[%s1 + $0x98] sm:$0xf]
  %v81 = vld [vmem:[%s1 + $0x9c] sm:$0xf]
  %v82 = vld [vmem:[%s1 + $0xa0] sm:$0xf]
  %v83 = vld [vmem:[%s1 + $0xa4] sm:$0xf]
  %v84 = vld [vmem:[%s1 + $0xa8] sm:$0xf]
  %v85 = vld [vmem:[%s1 + $0xac] sm:$0xf]
  %v86 = vld [vmem:[%s1 + $0xb0] sm:$0xf]
  %v87 = vld [vmem:[%s1 + $0xb4] sm:$0xf]
  %v88 = vld [vmem:[%s1 + $0xb8] sm:$0xf]
  %v89 = vld [vmem:[%s1 + $0xbc] sm:$0xf]
  %v90 = vld [vmem:[%s1 + $0xc0] sm:$0xf]
  %v91 = vld [vmem:[%s1 + $0xc4] sm:$0xf]
  %v92 = vld [vmem:[%s1 + $0xc8] sm:$0xf]
  %v93 = vld [vmem:[%s1 + $0xcc] sm:$0xf]
  %v94 = vld [vmem:[%s1 + $0xd0] sm:$0xf]
  %v95 = vld [vmem:[%s1 + $0xd4] sm:$0xf]
  %v96 = vld [vmem:[%s1 + $0xd8] sm:$0xf]
  %v97 = vld [vmem:[%s1 + $0xdc] sm:$0xf]
  %v98 = vld [vmem:[%s1 + $0xe0] sm:$0xf]
  %v99 = vld [vmem:[%s1 + $0xe4] sm:$0xf]
  %v100 = vld [vmem:[%s1 + $0xe8] sm:$0xf]
  %v101 = vld [vmem:[%s1 + $0xec] sm:$0xf]
  %v102 = vld [vmem:[%s1 + $0xf0] sm:$0xf]
  %v103 = vld [vmem:[%s1 + $0xf4] sm:$0xf]
  %v104 = vld [vmem:[%s1 + $0xf8] sm:$0xf]
  %v105 = vld [vmem:[%s1 + $0xfc] sm:$0xf]
  %v106 = vld [vmem:[%s1 + $0x100] sm:$0xf]
  %v107 = vld [vmem:[%s1 + $0x104] sm:$0xf]
  %v108 = vld [vmem:[%s1 + $0x108] sm:$0xf]
  %v109 = vld [vmem:[%s1 + $0x10c] sm:$0xf]
  %v110 = vld [vmem:[%s1 + $0x110] sm:$0xf]
  %v111 = vld [vmem:[%s1 + $0x114] sm:$0xf]
  %v112 = vld [vmem:[%s1 + $0x118] sm:$0xf]
  %v113 = vld [vmem:[%s1 + $0x11c] sm:$0xf]
  %v114 = vld [vmem:[%s1 + $0x120] sm:$0xf]
  %v115 = vld [vmem:[%s1 + $0x124] sm:$0xf]
  %v116 = vld [vmem:[%s1 + $0x128] sm:$0xf]
  %v117 = vld [vmem:[%s1 + $0x12c] sm:$0xf]
  %v118 = vld [vmem:[%s1 + $0x130] sm:$0xf]
  %v119 = vld [vmem:[%s1 + $0x134] sm:$0xf]
  %v120 = vld [vmem:[%s1 + $0x138] sm:$0xf]
  %v121 = vld [vmem:[%s1 + $0x13c] sm:$0xf]
  %v122 = vld [vmem:[%s1 + $0x140] sm:$0xf]
  %v123 = vld [vmem:[%s1 + $0x144] sm:$0xf]
  %v124 = vld [vmem:[%s1 + $0x148] sm:$0xf]
  %v125 = vld [vmem:[%s1 + $0x14c] sm:$0xf]
  %v126 = vld [vmem:[%s1 + $0x150] sm:$0xf]
  %v127 = vld [vmem:[%s1 + $0x154] sm:$0xf]
  %v128 = vld [vmem:[%s1 + $0x158] sm:$0xf]
  %v129 = vld [vmem:[%s1 + $0x15c] sm:$0xf]
  %v130 = vld [vmem:[%s1 + $0x160] sm:$0xf]
  %v131 = vld [vmem:[%s1 + $0x164] sm:$0xf]
  %v132 = vld [vmem:[%s1 + $0x168] sm:$0xf]
  %v133 = vld [vmem:[%s1 + $0x16c] sm:$0xf]
  %v134 = vld [vmem:[%s1 + $0x170] sm:$0xf]
  %v135 = vld [vmem:[%s1 + $0x174] sm:$0xf]
  %v136 = vld [vmem:[%s1 + $0x178] sm:$0xf]
  %v137 = vld [vmem:[%s1 + $0x17c] sm:$0xf]
  %v138 = vld [vmem:[%s1 + $0x180] sm:$0xf]
  %v139 = vld [vmem:[%s1 + $0x184] sm:$0xf]
  %v140 = vld [vmem:[%s1 + $0x188] sm:$0xf]
  %v141 = vld [vmem:[%s1 + $0x18c] sm:$0xf]
  %v142 = vld [vmem:[%s1 + $0x190] sm:$0xf]
  %v143 = vld [vmem:[%s1 + $0x194] sm:$0xf]
  %v144 = vld [vmem:[%s1 + $0x198] sm:$0xf]
  %v145 = vld [vmem:[%s1 + $0x19c] sm:$0xf]
  %v146 = vld [vmem:[%s1 + $0x1a0] sm:$0xf]
  %v147 = vld [vmem:[%s1 + $0x1a4] sm:$0xf]
  %v148 = vld [vmem:[%s1 + $0x1a8] sm:$0xf]
  %v149 = vld [vmem:[%s1 + $0x1ac] sm:$0xf]
  %v150 = vld [vmem:[%s1 + $0x1b0] sm:$0xf]
  %v151 = vld [vmem:[%s1 + $0x1b4] sm:$0xf]
  %v152 = vld [vmem:[%s1 + $0x1b8] sm:$0xf]
  %v153 = vld [vmem:[%s1 + $0x1bc] sm:$0xf]
  %v154 = vld [vmem:[%s1 + $0x1c0] sm:$0xf]
  %v155 = vld [vmem:[%s1 + $0x1c4] sm:$0xf]
  %v156 = vld [vmem:[%s1 + $0x1c8] sm:$0xf]
  %v157 = vld [vmem:[%s1 + $0x1cc] sm:$0xf]
  %v158 = vld [vmem:[%s1 + $0x1d0] sm:$0xf]
  %v159 = vld [vmem:[%s1 + $0x1d4] sm:$0xf]
  %v160 = vld [vmem:[%s1 + $0x1d8] sm:$0xf]
  %v161 = vld [vmem:[%s1 + $0x1dc] sm:$0xf]
  %v162 = vld [vmem:[%s1 + $0x1e0] sm:$0xf]
  %v163 = vld [vmem:[%s1 + $0x1e4] sm:$0xf]
  %v164 = vld [vmem:[%s1 + $0x1e8] sm:$0xf]
  %v165 = vld [vmem:[%s1 + $0x1ec] sm:$0xf]
  %v166 = vld [vmem:[%s1 + $0x1f0] sm:$0xf]
  %v167 = vld [vmem:[%s1 + $0x1f4] sm:$0xf]
  %v168 = vld [vmem:[%s1 + $0x1f8] sm:$0xf]
  %v169 = vld [vmem:[%s1 + $0x1fc] sm:$0xf]
  %v170 = vld [vmem:[%s2] sm:$0x1]
  %v172 = vperm.slane %v170, 0
  %v302 = vunpack.c.l.b16 %v42
  %v303 = vunpack.c.l.b16 %v43
  %v304 = vunpack.c.l.b16 %v44
  %v305 = vunpack.c.l.b16 %v45
  %v306 = vunpack.c.l.b16 %v46
  %v307 = vunpack.c.l.b16 %v47
  %v308 = vunpack.c.l.b16 %v48
  %v309 = vunpack.c.l.b16 %v49
  %v310 = vunpack.c.l.b16 %v50
  %v311 = vunpack.c.l.b16 %v51
  %v312 = vunpack.c.l.b16 %v52
  %v313 = vunpack.c.l.b16 %v53
  %v314 = vunpack.c.l.b16 %v54
  %v315 = vunpack.c.l.b16 %v55
  %v316 = vunpack.c.l.b16 %v56
  %v317 = vunpack.c.l.b16 %v57
  %v318 = vunpack.c.l.b16 %v58
  %v319 = vunpack.c.l.b16 %v59
  %v320 = vunpack.c.l.b16 %v60
  %v321 = vunpack.c.l.b16 %v61
  %v322 = vunpack.c.l.b16 %v62
  %v323 = vunpack.c.l.b16 %v63
  %v324 = vunpack.c.l.b16 %v64
  %v325 = vunpack.c.l.b16 %v65
  %v326 = vunpack.c.l.b16 %v66
  %v327 = vunpack.c.l.b16 %v67
  %v328 = vunpack.c.l.b16 %v68
  %v329 = vunpack.c.l.b16 %v69
  %v330 = vunpack.c.l.b16 %v70
  %v331 = vunpack.c.l.b16 %v71
  %v332 = vunpack.c.l.b16 %v72
  %v333 = vunpack.c.l.b16 %v73
  %v334 = vunpack.c.l.b16 %v74
  %v335 = vunpack.c.l.b16 %v75
  %v336 = vunpack.c.l.b16 %v76
  %v337 = vunpack.c.l.b16 %v77
  %v338 = vunpack.c.l.b16 %v78
  %v339 = vunpack.c.l.b16 %v79
  %v340 = vunpack.c.l.b16 %v80
  %v341 = vunpack.c.l.b16 %v81
  %v342 = vunpack.c.l.b16 %v82
  %v343 = vunpack.c.l.b16 %v83
  %v344 = vunpack.c.l.b16 %v84
  %v345 = vunpack.c.l.b16 %v85
  %v346 = vunpack.c.l.b16 %v86
  %v347 = vunpack.c.l.b16 %v87
  %v348 = vunpack.c.l.b16 %v88
  %v349 = vunpack.c.l.b16 %v89
  %v350 = vunpack.c.l.b16 %v90
  %v351 = vunpack.c.l.b16 %v91
  %v352 = vunpack.c.l.b16 %v92
  %v353 = vunpack.c.l.b16 %v93
  %v354 = vunpack.c.l.b16 %v94
  %v355 = vunpack.c.l.b16 %v95
  %v356 = vunpack.c.l.b16 %v96
  %v357 = vunpack.c.l.b16 %v97
  %v358 = vunpack.c.l.b16 %v98
  %v359 = vunpack.c.l.b16 %v99
  %v360 = vunpack.c.l.b16 %v100
  %v361 = vunpack.c.l.b16 %v101
  %v362 = vunpack.c.l.b16 %v102
  %v363 = vunpack.c.l.b16 %v103
  %v364 = vunpack.c.l.b16 %v104
  %v365 = vunpack.c.l.b16 %v105
  %v366 = vunpack.c.l.b16 %v106
  %v367 = vunpack.c.l.b16 %v107
  %v368 = vunpack.c.l.b16 %v108
  %v369 = vunpack.c.l.b16 %v109
  %v370 = vunpack.c.l.b16 %v110
  %v371 = vunpack.c.l.b16 %v111
  %v372 = vunpack.c.l.b16 %v112
  %v373 = vunpack.c.l.b16 %v113
  %v374 = vunpack.c.l.b16 %v114
  %v375 = vunpack.c.l.b16 %v115
  %v376 = vunpack.c.l.b16 %v116
  %v377 = vunpack.c.l.b16 %v117
  %v378 = vunpack.c.l.b16 %v118
  %v379 = vunpack.c.l.b16 %v119
  %v380 = vunpack.c.l.b16 %v120
  %v381 = vunpack.c.l.b16 %v121
  %v382 = vunpack.c.l.b16 %v122
  %v383 = vunpack.c.l.b16 %v123
  %v384 = vunpack.c.l.b16 %v124
  %v385 = vunpack.c.l.b16 %v125
  %v386 = vunpack.c.l.b16 %v126
  %v387 = vunpack.c.l.b16 %v127
  %v388 = vunpack.c.l.b16 %v128
  %v389 = vunpack.c.l.b16 %v129
  %v390 = vunpack.c.l.b16 %v130
  %v391 = vunpack.c.l.b16 %v131
  %v392 = vunpack.c.l.b16 %v132
  %v393 = vunpack.c.l.b16 %v133
  %v394 = vunpack.c.l.b16 %v134
  %v395 = vunpack.c.l.b16 %v135
  %v396 = vunpack.c.l.b16 %v136
  %v397 = vunpack.c.l.b16 %v137
  %v398 = vunpack.c.l.b16 %v138
  %v399 = vunpack.c.l.b16 %v139
  %v400 = vunpack.c.l.b16 %v140
  %v401 = vunpack.c.l.b16 %v141
  %v402 = vunpack.c.l.b16 %v142
  %v403 = vunpack.c.l.b16 %v143
  %v404 = vunpack.c.l.b16 %v144
  %v405 = vunpack.c.l.b16 %v145
  %v406 = vunpack.c.l.b16 %v146
  %v407 = vunpack.c.l.b16 %v147
  %v408 = vunpack.c.l.b16 %v148
  %v409 = vunpack.c.l.b16 %v149
  %v410 = vunpack.c.l.b16 %v150
  %v411 = vunpack.c.l.b16 %v151
  %v412 = vunpack.c.l.b16 %v152
  %v413 = vunpack.c.l.b16 %v153
  %v414 = vunpack.c.l.b16 %v154
  %v415 = vunpack.c.l.b16 %v155
  %v416 = vunpack.c.l.b16 %v156
  %v417 = vunpack.c.l.b16 %v157
  %v418 = vunpack.c.l.b16 %v158
  %v419 = vunpack.c.l.b16 %v159
  %v420 = vunpack.c.l.b16 %v160
  %v421 = vunpack.c.l.b16 %v161
  %v422 = vunpack.c.l.b16 %v162
  %v423 = vunpack.c.l.b16 %v163
  %v424 = vunpack.c.l.b16 %v164
  %v425 = vunpack.c.l.b16 %v165
  %v426 = vunpack.c.l.b16 %v166
  %v427 = vunpack.c.l.b16 %v167
  %v428 = vunpack.c.l.b16 %v168
  %v429 = vunpack.c.l.b16 %v169
  %v430 = vpack.c.b16 %v303, %v302
  %v431 = vpack.c.b16 %v305, %v304
  %v432 = vpack.c.b16 %v307, %v306
  %v433 = vpack.c.b16 %v309, %v308
  %v434 = vpack.c.b16 %v311, %v310
  %v435 = vpack.c.b16 %v313, %v312
  %v436 = vpack.c.b16 %v315, %v314
  %v437 = vpack.c.b16 %v317, %v316
  %v438 = vpack.c.b16 %v319, %v318
  %v439 = vpack.c.b16 %v321, %v320
  %v440 = vpack.c.b16 %v323, %v322
  %v441 = vpack.c.b16 %v325, %v324
  %v442 = vpack.c.b16 %v327, %v326
  %v443 = vpack.c.b16 %v329, %v328
  %v444 = vpack.c.b16 %v331, %v330
  %v445 = vpack.c.b16 %v333, %v332
  %v446 = vpack.c.b16 %v335, %v334
  %v447 = vpack.c.b16 %v337, %v336
  %v448 = vpack.c.b16 %v339, %v338
  %v449 = vpack.c.b16 %v341, %v340
  %v450 = vpack.c.b16 %v343, %v342
  %v451 = vpack.c.b16 %v345, %v344
  %v452 = vpack.c.b16 %v347, %v346
  %v453 = vpack.c.b16 %v349, %v348
  %v454 = vpack.c.b16 %v351, %v350
  %v455 = vpack.c.b16 %v353, %v352
  %v456 = vpack.c.b16 %v355, %v354
  %v457 = vpack.c.b16 %v357, %v356
  %v458 = vpack.c.b16 %v359, %v358
  %v459 = vpack.c.b16 %v361, %v360
  %v460 = vpack.c.b16 %v363, %v362
  %v461 = vpack.c.b16 %v365, %v364
  %v462 = vpack.c.b16 %v367, %v366
  %v463 = vpack.c.b16 %v369, %v368
  %v464 = vpack.c.b16 %v371, %v370
  %v465 = vpack.c.b16 %v373, %v372
  %v466 = vpack.c.b16 %v375, %v374
  %v467 = vpack.c.b16 %v377, %v376
  %v468 = vpack.c.b16 %v379, %v378
  %v469 = vpack.c.b16 %v381, %v380
  %v470 = vpack.c.b16 %v383, %v382
  %v471 = vpack.c.b16 %v385, %v384
  %v472 = vpack.c.b16 %v387, %v386
  %v473 = vpack.c.b16 %v389, %v388
  %v474 = vpack.c.b16 %v391, %v390
  %v475 = vpack.c.b16 %v393, %v392
  %v476 = vpack.c.b16 %v395, %v394
  %v477 = vpack.c.b16 %v397, %v396
  %v478 = vpack.c.b16 %v399, %v398
  %v479 = vpack.c.b16 %v401, %v400
  %v480 = vpack.c.b16 %v403, %v402
  %v481 = vpack.c.b16 %v405, %v404
  %v482 = vpack.c.b16 %v407, %v406
  %v483 = vpack.c.b16 %v409, %v408
  %v484 = vpack.c.b16 %v411, %v410
  %v485 = vpack.c.b16 %v413, %v412
  %v486 = vpack.c.b16 %v415, %v414
  %v487 = vpack.c.b16 %v417, %v416
  %v488 = vpack.c.b16 %v419, %v418
  %v489 = vpack.c.b16 %v421, %v420
  %v490 = vpack.c.b16 %v423, %v422
  %v491 = vpack.c.b16 %v425, %v424
  %v492 = vpack.c.b16 %v427, %v426
  %v493 = vpack.c.b16 %v429, %v428
  %558 = vmatpush.bf16.msra.mxu0 %v437
  %559 = vmatpush.bf16.msra.mxu0 %v436
  %560 = vmatpush.bf16.msra.mxu0 %v435
  %561 = vmatpush.bf16.msra.mxu0 %v434
  %562 = vmatpush.bf16.msra.mxu0 %v433
  %563 = vmatpush.bf16.msra.mxu0 %v432
  %564 = vmatpush.bf16.msra.mxu0 %v431
  %565 = vmatpush.bf16.msra.mxu0 %v430
  %566 = vmatmul.bf16.gmra.mxu0 %v34
  %v567 = vpop.f32.mrf.mxu0
  %v568 = vadd.f32 %v172, %v567
  %v569 = vpop.f32.mrf.mxu0
  %570 = vdwg.mxu0
  %571 = vmatpush.bf16.msra.mxu0 %v445
  %572 = vmatpush.bf16.msra.mxu0 %v444
  %573 = vmatpush.bf16.msra.mxu0 %v443
  %574 = vmatpush.bf16.msra.mxu0 %v442
  %575 = vmatpush.bf16.msra.mxu0 %v441
  %576 = vmatpush.bf16.msra.mxu0 %v440
  %577 = vmatpush.bf16.msra.mxu0 %v439
  %578 = vmatpush.bf16.msra.mxu0 %v438
  %579 = vmatmul.bf16.gmra.mxu0 %v35
  %v580 = vpop.f32.mrf.mxu0
  %v581 = vadd.f32 %v568, %v580
  %v582 = vpop.f32.mrf.mxu0
  %583 = vdwg.mxu0
  %584 = vmatpush.bf16.msra.mxu0 %v453
  %585 = vmatpush.bf16.msra.mxu0 %v452
  %586 = vmatpush.bf16.msra.mxu0 %v451
  %587 = vmatpush.bf16.msra.mxu0 %v450
  %588 = vmatpush.bf16.msra.mxu0 %v449
  %589 = vmatpush.bf16.msra.mxu0 %v448
  %590 = vmatpush.bf16.msra.mxu0 %v447
  %591 = vmatpush.bf16.msra.mxu0 %v446
  %592 = vmatmul.bf16.gmra.mxu0 %v36
  %v593 = vpop.f32.mrf.mxu0
  %v594 = vadd.f32 %v581, %v593
  %v595 = vpop.f32.mrf.mxu0
  %596 = vdwg.mxu0
  %597 = vmatpush.bf16.msra.mxu0 %v461
  %598 = vmatpush.bf16.msra.mxu0 %v460
  %599 = vmatpush.bf16.msra.mxu0 %v459
  %600 = vmatpush.bf16.msra.mxu0 %v458
  %601 = vmatpush.bf16.msra.mxu0 %v457
  %602 = vmatpush.bf16.msra.mxu0 %v456
  %603 = vmatpush.bf16.msra.mxu0 %v455
  %604 = vmatpush.bf16.msra.mxu0 %v454
  %605 = vmatmul.bf16.gmra.mxu0 %v37
  %v606 = vpop.f32.mrf.mxu0
  %v607 = vadd.f32 %v594, %v606
  %v608 = vpop.f32.mrf.mxu0
  %609 = vdwg.mxu0
  %610 = vmatpush.bf16.msra.mxu0 %v469
  %611 = vmatpush.bf16.msra.mxu0 %v468
  %612 = vmatpush.bf16.msra.mxu0 %v467
  %613 = vmatpush.bf16.msra.mxu0 %v466
  %614 = vmatpush.bf16.msra.mxu0 %v465
  %615 = vmatpush.bf16.msra.mxu0 %v464
  %616 = vmatpush.bf16.msra.mxu0 %v463
  %617 = vmatpush.bf16.msra.mxu0 %v462
  %618 = vmatmul.bf16.gmra.mxu0 %v38
  %v619 = vpop.f32.mrf.mxu0
  %v620 = vadd.f32 %v607, %v619
  %v621 = vpop.f32.mrf.mxu0
  %622 = vdwg.mxu0
  %623 = vmatpush.bf16.msra.mxu0 %v477
  %624 = vmatpush.bf16.msra.mxu0 %v476
  %625 = vmatpush.bf16.msra.mxu0 %v475
  %626 = vmatpush.bf16.msra.mxu0 %v474
  %627 = vmatpush.bf16.msra.mxu0 %v473
  %628 = vmatpush.bf16.msra.mxu0 %v472
  %629 = vmatpush.bf16.msra.mxu0 %v471
  %630 = vmatpush.bf16.msra.mxu0 %v470
  %631 = vmatmul.bf16.gmra.mxu0 %v39
  %v632 = vpop.f32.mrf.mxu0
  %v633 = vadd.f32 %v620, %v632
  %v634 = vpop.f32.mrf.mxu0
  %635 = vdwg.mxu0
  %636 = vmatpush.bf16.msra.mxu0 %v485
  %637 = vmatpush.bf16.msra.mxu0 %v484
  %638 = vmatpush.bf16.msra.mxu0 %v483
  %639 = vmatpush.bf16.msra.mxu0 %v482
  %640 = vmatpush.bf16.msra.mxu0 %v481
  %641 = vmatpush.bf16.msra.mxu0 %v480
  %642 = vmatpush.bf16.msra.mxu0 %v479
  %643 = vmatpush.bf16.msra.mxu0 %v478
  %644 = vmatmul.bf16.gmra.mxu0 %v40
  %v645 = vpop.f32.mrf.mxu0
  %v646 = vadd.f32 %v633, %v645
  %v647 = vpop.f32.mrf.mxu0
  %648 = vdwg.mxu0
  %649 = vmatpush.bf16.msra.mxu0 %v493
  %650 = vmatpush.bf16.msra.mxu0 %v492
  %651 = vmatpush.bf16.msra.mxu0 %v491
  %652 = vmatpush.bf16.msra.mxu0 %v490
  %653 = vmatpush.bf16.msra.mxu0 %v489
  %654 = vmatpush.bf16.msra.mxu0 %v488
  %655 = vmatpush.bf16.msra.mxu0 %v487
  %656 = vmatpush.bf16.msra.mxu0 %v486
  %657 = vmatmul.bf16.gmra.mxu0 %v41
  %v658 = vpop.f32.mrf.mxu0
  %v659 = vadd.f32 %v646, %v658
  %v660 = vpop.f32.mrf.mxu0
  %661 = vdwg.mxu0
  %v662 = vmul.f32 %v659, 0.01
  %v663 = vmax.f32 %v659, %v662
  %v664 = vpack.c.bf16 %v663, %v663
  %v665 = vld [vmem:[%s3] sm:$0xf]
  %v666 = vld [vmem:[%s3 + $0x4] sm:$0xf]
  %v667 = vld [vmem:[%s3 + $0x8] sm:$0xf]
  %v668 = vld [vmem:[%s3 + $0xc] sm:$0xf]
  %v669 = vld [vmem:[%s3 + $0x10] sm:$0xf]
  %v670 = vld [vmem:[%s3 + $0x14] sm:$0xf]
  %v671 = vld [vmem:[%s3 + $0x18] sm:$0xf]
  %v672 = vld [vmem:[%s3 + $0x1c] sm:$0xf]
  %v673 = vld [vmem:[%s3 + $0x20] sm:$0xf]
  %v674 = vld [vmem:[%s3 + $0x24] sm:$0xf]
  %v675 = vld [vmem:[%s3 + $0x28] sm:$0xf]
  %v676 = vld [vmem:[%s3 + $0x2c] sm:$0xf]
  %v677 = vld [vmem:[%s3 + $0x30] sm:$0xf]
  %v678 = vld [vmem:[%s3 + $0x34] sm:$0xf]
  %v679 = vld [vmem:[%s3 + $0x38] sm:$0xf]
  %v680 = vld [vmem:[%s3 + $0x3c] sm:$0xf]
  %v681 = vld [vmem:[%s4] sm:$0x1]
  %v683 = vperm.slane %v681, 0
  %v701 = vunpack.c.l.b16 %v665
  %v702 = vunpack.c.l.b16 %v666
  %v703 = vunpack.c.l.b16 %v667
  %v704 = vunpack.c.l.b16 %v668
  %v705 = vunpack.c.l.b16 %v669
  %v706 = vunpack.c.l.b16 %v670
  %v707 = vunpack.c.l.b16 %v671
  %v708 = vunpack.c.l.b16 %v672
  %v709 = vunpack.c.l.b16 %v673
  %v710 = vunpack.c.l.b16 %v674
  %v711 = vunpack.c.l.b16 %v675
  %v712 = vunpack.c.l.b16 %v676
  %v713 = vunpack.c.l.b16 %v677
  %v714 = vunpack.c.l.b16 %v678
  %v715 = vunpack.c.l.b16 %v679
  %v716 = vunpack.c.l.b16 %v680
  %v717 = vpack.c.b16 %v702, %v701
  %v718 = vpack.c.b16 %v704, %v703
  %v719 = vpack.c.b16 %v706, %v705
  %v720 = vpack.c.b16 %v708, %v707
  %v721 = vpack.c.b16 %v710, %v709
  %v722 = vpack.c.b16 %v712, %v711
  %v723 = vpack.c.b16 %v714, %v713
  %v724 = vpack.c.b16 %v716, %v715
  %733 = vmatpush.bf16.msra.mxu0 %v724
  %734 = vmatpush.bf16.msra.mxu0 %v723
  %735 = vmatpush.bf16.msra.mxu0 %v722
  %736 = vmatpush.bf16.msra.mxu0 %v721
  %737 = vmatpush.bf16.msra.mxu0 %v720
  %738 = vmatpush.bf16.msra.mxu0 %v719
  %739 = vmatpush.bf16.msra.mxu0 %v718
  %740 = vmatpush.bf16.msra.mxu0 %v717
  %741 = vmatmul.bf16.gmra.mxu0 %v664
  %v742 = vpop.f32.mrf.mxu0
  %v743 = vadd.f32 %v683, %v742
  %v744 = vpop.f32.mrf.mxu0
  %745 = vdwg.mxu0
  %v746 = vmul.f32 %v743, 0.01
  %v747 = vmax.f32 %v743, %v746
  %v748 = vpack.c.bf16 %v747, %v747
  %v749 = vld [vmem:[%s5] sm:$0xf]
  %v750 = vld [vmem:[%s5 + $0x4] sm:$0xf]
  %v751 = vld [vmem:[%s5 + $0x8] sm:$0xf]
  %v752 = vld [vmem:[%s5 + $0xc] sm:$0xf]
  %v753 = vld [vmem:[%s5 + $0x10] sm:$0xf]
  %v754 = vld [vmem:[%s5 + $0x14] sm:$0xf]
  %v755 = vld [vmem:[%s5 + $0x18] sm:$0xf]
  %v756 = vld [vmem:[%s5 + $0x1c] sm:$0xf]
  %v757 = vld [vmem:[%s5 + $0x20] sm:$0xf]
  %v758 = vld [vmem:[%s5 + $0x24] sm:$0xf]
  %v759 = vld [vmem:[%s5 + $0x28] sm:$0xf]
  %v760 = vld [vmem:[%s5 + $0x2c] sm:$0xf]
  %v761 = vld [vmem:[%s5 + $0x30] sm:$0xf]
  %v762 = vld [vmem:[%s5 + $0x34] sm:$0xf]
  %v763 = vld [vmem:[%s5 + $0x38] sm:$0xf]
  %v764 = vld [vmem:[%s5 + $0x3c] sm:$0xf]
  %v765 = vld [vmem:[%s6] sm:$0x1]
  %v767 = vperm.slane %v765, 0
  %v785 = vunpack.c.l.b16 %v749
  %v786 = vunpack.c.l.b16 %v750
  %v787 = vunpack.c.l.b16 %v751
  %v788 = vunpack.c.l.b16 %v752
  %v789 = vunpack.c.l.b16 %v753
  %v790 = vunpack.c.l.b16 %v754
  %v791 = vunpack.c.l.b16 %v755
  %v792 = vunpack.c.l.b16 %v756
  %v793 = vunpack.c.l.b16 %v757
  %v794 = vunpack.c.l.b16 %v758
  %v795 = vunpack.c.l.b16 %v759
  %v796 = vunpack.c.l.b16 %v760
  %v797 = vunpack.c.l.b16 %v761
  %v798 = vunpack.c.l.b16 %v762
  %v799 = vunpack.c.l.b16 %v763
  %v800 = vunpack.c.l.b16 %v764
  %v801 = vpack.c.b16 %v786, %v785
  %v802 = vpack.c.b16 %v788, %v787
  %v803 = vpack.c.b16 %v790, %v789
  %v804 = vpack.c.b16 %v792, %v791
  %v805 = vpack.c.b16 %v794, %v793
  %v806 = vpack.c.b16 %v796, %v795
  %v807 = vpack.c.b16 %v798, %v797
  %v808 = vpack.c.b16 %v800, %v799
  %817 = vmatpush.bf16.msra.mxu0 %v808
  %818 = vmatpush.bf16.msra.mxu0 %v807
  %819 = vmatpush.bf16.msra.mxu0 %v806
  %820 = vmatpush.bf16.msra.mxu0 %v805
  %821 = vmatpush.bf16.msra.mxu0 %v804
  %822 = vmatpush.bf16.msra.mxu0 %v803
  %823 = vmatpush.bf16.msra.mxu0 %v802
  %824 = vmatpush.bf16.msra.mxu0 %v801
  %825 = vmatmul.bf16.gmra.mxu0 %v748
  %v826 = vpop.f32.mrf.mxu0
  %v827 = vadd.f32 %v767, %v826
  %v828 = vpop.f32.mrf.mxu0
  %829 = vdwg.mxu0
  %v830 = vmul.f32 %v827, 0.01
  %v831 = vmax.f32 %v827, %v830
  %832 = vst [vmem:[%s7] sm:$0xff] %v831
  // Predicated region
  $region30: #{neural_net_forward.1} parent=0 // pred_check
    _
  $region31: #{neural_net_forward.1} parent=0 // pred_check_branch
    %834 = sbr.rel (0) target = $region33
  $region32: #{neural_net_forward.1} parent=0 // pred_region
    _
  $region33: #{neural_net_forward.1} parent=0 // pred_fallthru
    _
  // Predicated region
  $region34: #{neural_net_forward.1} parent=0 // pred_check
    _
  $region35: #{neural_net_forward.1} parent=0 // pred_check_branch
    %836 = sbr.rel (0) target = $region37
  $region36: #{neural_net_forward.1} parent=0 // pred_region
    _
  $region37: #{neural_net_forward.1} parent=0 // pred_fallthru
    _

</llo_original>
